<compile_context>
chip_gen: v6e
topology: v6e:2x2x1
jax: 0.10.0
libtpu: 0.0.40
codegen_flags: <defaults>
</compile_context>

<pallas_src>
import functools

import numpy as np
import jax
import jax.numpy as jnp
from jax.experimental import pallas as pl
from jax.experimental.pallas import tpu as pltpu

EPS = 1e-5


def _fold_bn(gamma, beta, mean, var):
    s = gamma / jnp.sqrt(var + EPS)
    b = beta - mean * s
    return s, b


def _pick_tile(n, cap, align=1):
    """Largest t <= cap that divides n and is `align`-aligned (else n itself)."""
    if n <= cap:
        return n
    for t in range(cap, 0, -1):
        if n % t == 0 and t % align == 0:
            return t
    return n


def _vmem_limit(bytes_needed):
    # Clamp: >=16 MiB (cheap default), <=48 MiB (safe inside v7x's 64 MiB VMEM).
    return int(min(max(bytes_needed, 16 << 20), 48 << 20))


# ---------------------------------------------------------------------------
# Kernel 1: 1x1 conv (matmul, BN scale pre-folded into W) + bias
#           + optional residual + ReLU.  Tiled over the token (row) dim.
# ---------------------------------------------------------------------------
def _pw_kernel(x_ref, w_ref, b_ref, o_ref, *, relu_in):
    x = x_ref[...]
    if relu_in:  # standalone relu applied to the *input* (before conv_up)
        x = jnp.maximum(x, 0.0)
    y = jnp.dot(x, w_ref[...], preferred_element_type=jnp.float32) + b_ref[...]
    o_ref[...] = jnp.maximum(y, 0.0).astype(o_ref.dtype)


def _pw_res_kernel(x_ref, w_ref, b_ref, res_ref, o_ref, *, relu_in):
    x = x_ref[...]
    if relu_in:
        x = jnp.maximum(x, 0.0)
    y = (jnp.dot(x, w_ref[...], preferred_element_type=jnp.float32)
         + b_ref[...] + res_ref[...])
    o_ref[...] = jnp.maximum(y, 0.0).astype(o_ref.dtype)


def pointwise_conv(x_flat, w_cin_cout, bias, *, residual=None, relu_in=False,
                   tile_m=1024):
    """relu(maybe_relu(x) @ W + b [+ residual]) on a flattened token matrix."""
    M, Cin = x_flat.shape
    Cout = w_cin_cout.shape[1]
    tm = _pick_tile(M, tile_m, align=8)     # exact divisor -> no padded rows
    grid = (M // tm,)

    in_specs = [
        pl.BlockSpec((tm, Cin), lambda i: (i, 0)),
        pl.BlockSpec((Cin, Cout), lambda i: (0, 0)),
        pl.BlockSpec((1, Cout), lambda i: (0, 0)),
    ]
    args = [x_flat, w_cin_cout, bias.reshape(1, Cout)]
    if residual is not None:
        kern = functools.partial(_pw_res_kernel, relu_in=relu_in)
        in_specs.append(pl.BlockSpec((tm, Cout), lambda i: (i, 0)))
        args.append(residual)
    else:
        kern = functools.partial(_pw_kernel, relu_in=relu_in)

    blk_bytes = 4 * (tm * Cin + Cin * Cout + Cout + tm * Cout)
    if residual is not None:
        blk_bytes += 4 * tm * Cout

    return pl.pallas_call(
        kern,
        grid=grid,
        in_specs=in_specs,
        out_specs=pl.BlockSpec((tm, Cout), lambda i: (i, 0)),
        out_shape=jax.ShapeDtypeStruct((M, Cout), jnp.float32),
        compiler_params=pltpu.CompilerParams(
            dimension_semantics=("parallel",),
            vmem_limit_bytes=_vmem_limit(3 * blk_bytes)),
    )(*args)


# ---------------------------------------------------------------------------
# Kernel 2: axial attention (AxialAttention_wopos).
#   * Reads / writes the NHWC buffer directly through 4-D BlockSpecs.
#   * qkv weight columns pre-permuted to [q|k|v] chunks (group-major inside),
#     BN scales folded into the weight; exact softmax; batched group einsums.
# ---------------------------------------------------------------------------
def _axial_attn_kernel(x_ref, w_ref, b_ref, ob_ref, o_ref, *, groups, gp,
                       seq_first):
    half = gp // 2
    x = x_ref[0]                                   # (H, tb, C) or (tb, W, C)
    if seq_first:                                  # height attn: reorder in VMEM
        x = jnp.transpose(x, (1, 0, 2))            # -> (tb, L, C)
    TB, L, C = x.shape

    # qkv transform (1x1 Conv1d) as one MXU matmul over TB*L tokens.
    qkv = jnp.dot(x.reshape(TB * L, C), w_ref[...],
                  preferred_element_type=jnp.float32) + b_ref[...]

    qh = groups * half
    q = qkv[:, :qh]
    k = qkv[:, qh:2 * qh]
    v = qkv[:, 2 * qh:]
    if groups == 1:                                # pure reshapes
        q = q.reshape(TB, L, half)
        k = k.reshape(TB, L, half)
        v = v.reshape(TB, L, gp)
    else:                                          # fold groups into batch dim
        q = q.reshape(TB, L, groups, half).transpose(0, 2, 1, 3)
        q = q.reshape(TB * groups, L, half)
        k = k.reshape(TB, L, groups, half).transpose(0, 2, 1, 3)
        k = k.reshape(TB * groups, L, half)
        v = v.reshape(TB, L, groups, gp).transpose(0, 2, 1, 3)
        v = v.reshape(TB * groups, L, gp)

    sim = jnp.einsum('bic,bjc->bij', q, k, preferred_element_type=jnp.float32)
    m = jnp.max(sim, axis=-1, keepdims=True)
    e = jnp.exp(sim - m)
    p = e / jnp.sum(e, axis=-1, keepdims=True)     # exact softmax normalization
    sv = jnp.einsum('bij,bjc->bic', p, v, preferred_element_type=jnp.float32)

    if groups == 1:
        out = sv                                   # (TB, L, out_planes)
    else:
        out = sv.reshape(TB, groups, L, gp).transpose(0, 2, 1, 3)
        out = out.reshape(TB, L, groups * gp)      # group-major channels
    out = out + ob_ref[...]                        # single broadcast per tile
    if seq_first:
        out = jnp.transpose(out, (1, 0, 2))        # back to (L, tb, op)
    o_ref[0] = out.astype(o_ref.dtype)


def axial_attention_wopos(x_nhwc, p, groups, gp, *, axis, tile_batch=32):
    """Axial attention over `axis` (1 = H, 2 = W) of an NHWC tensor."""
    N, H, W, C = x_nhwc.shape
    out_planes = p['wqkv'].shape[0] // 2
    half = gp // 2

    qs, qb = _fold_bn(*p['bn_qkv'])
    ss, _sb = _fold_bn(*p['bn_sim'])   # bias is constant per softmax row -> dropped
    os_, ob = _fold_bn(*p['bn_out'])

    # Reorder qkv rows from PyTorch's per-group [q|k|v] interleave into three
    # contiguous chunks [q(all g) | k(all g) | v(all g)], group-major within each
    # chunk; fold bn_qkv scale, bn_similarity scale (into q) and bn_output scale
    # (into v) directly into the weight.
    q_idx, k_idx, v_idx = [], [], []
    for g in range(groups):
        base = g * 2 * gp
        q_idx += list(range(base, base + half))
        k_idx += list(range(base + half, base + gp))
        v_idx += list(range(base + gp, base + 2 * gp))
    perm = np.array(q_idx + k_idx + v_idx)

    fac = jnp.concatenate([
        jnp.repeat(ss, half),                       # q columns *= bn_similarity scale
        jnp.ones((groups * half,), jnp.float32),    # k columns unchanged
        os_,                                        # v columns *= bn_output scale
    ])
    scale = qs[perm] * fac
    w_eff = (p['wqkv'][perm] * scale[:, None]).T    # (C, 2*out_planes)
    b_eff = (qb[perm] * fac).reshape(1, 2 * out_planes)
    ob_r = ob.reshape(1, 1, out_planes)

    if axis == 1:       # attend along H; batch over W columns
        L = H
        tb = _pick_tile(W, tile_batch, align=8)
        grid = (N, W // tb)
        in_block = (1, H, tb, C)
        out_block = (1, H, tb, out_planes)
        idx4 = lambda n, b: (n, 0, b, 0)
        seq_first = True
    elif axis == 2:     # attend along W; batch over H rows
        L = W
        tb = _pick_tile(H, tile_batch, align=1)
        grid = (N, H // tb)
        in_block = (1, tb, W, C)
        out_block = (1, tb, W, out_planes)
        idx4 = lambda n, b: (n, b, 0, 0)
        seq_first = False
    else:
        raise ValueError(axis)

    blk_bytes = 4 * (int(np.prod(in_block)) + int(np.prod(out_block))
                     + C * 2 * out_planes + 3 * out_planes)
    interm_bytes = 4 * (tb * L * 2 * out_planes
                        + 3 * tb * groups * L * L
                        + 2 * tb * L * out_planes)

    kern = functools.partial(_axial_attn_kernel, groups=groups, gp=gp,
                             seq_first=seq_first)
    return pl.pallas_call(
        kern,
        grid=grid,
        in_specs=[
            pl.BlockSpec(in_block, idx4),
            pl.BlockSpec((C, 2 * out_planes), lambda n, b: (0, 0)),
            pl.BlockSpec((1, 2 * out_planes), lambda n, b: (0, 0)),
            pl.BlockSpec((1, 1, out_planes), lambda n, b: (0, 0, 0)),
        ],
        out_specs=pl.BlockSpec(out_block, idx4),
        out_shape=jax.ShapeDtypeStruct((N, H, W, out_planes), jnp.float32),
        compiler_params=pltpu.CompilerParams(
            dimension_semantics=("parallel", "parallel"),
            vmem_limit_bytes=_vmem_limit(2 * blk_bytes + interm_bytes)),
    )(x_nhwc, w_eff, b_eff, ob_r)


# ---------------------------------------------------------------------------
# Full block forward (channel-last internally; only two layout transposes total)
# ---------------------------------------------------------------------------
def axial_block_forward(x, params):
    groups = params['groups']
    gp = params['group_planes']
    N, Cin, H, W = x.shape

    x_nhwc = jnp.transpose(x, (0, 2, 3, 1))               # layout transpose #1
    x_flat = x_nhwc.reshape(N * H * W, Cin)               # residual reused from here

    # conv_down -> bn1 -> relu   (bn1 scale folded into the weight)
    s1, b1 = _fold_bn(*params['bn1'])
    w1 = params['conv_down'].T * s1[None, :]              # (Cin, width)
    width_c = w1.shape[1]
    mid = pointwise_conv(x_flat, w1, b1).reshape(N, H, W, width_c)

    # height attention (seq = H) then width attention (seq = W); both operate
    # directly on the NHWC buffer through their BlockSpecs -- no HBM transposes.
    mid = axial_attention_wopos(mid, params['hight'], groups, gp, axis=1)
    mid = axial_attention_wopos(mid, params['width'], groups, gp, axis=2)
    op = mid.shape[-1]

    # relu -> conv_up -> bn2 -> (+identity) -> relu   (all inside one kernel)
    s2, b2 = _fold_bn(*params['bn2'])
    w2 = params['conv_up'].T * s2[None, :]                # (width, Cout)
    Cout = w2.shape[1]
    out_flat = pointwise_conv(mid.reshape(N * H * W, op), w2, b2,
                              residual=x_flat, relu_in=True)
    return jnp.transpose(out_flat.reshape(N, H, W, Cout), (0, 3, 1, 2))  # #2


# ---------------------------------------------------------------------------
# Pure-JAX reference (same eval-mode semantics) for a silent sanity check
# ---------------------------------------------------------------------------
def reference_forward(x, params):
    groups = params['groups']
    gp = params['group_planes']

    def bn4(y, stats):
        s, b = _fold_bn(*stats)
        return y * s.reshape(1, -1, 1, 1) + b.reshape(1, -1, 1, 1)

    def attn(y, p, width_flag):
        N, C, H, W = y.shape
        op = p['wqkv'].shape[0] // 2
        if width_flag:
            xr = y.transpose(0, 2, 1, 3).reshape(N * H, C, W)
        else:
            xr = y.transpose(0, 3, 1, 2).reshape(N * W, C, H)
        B, _, L = xr.shape
        qkv = jnp.einsum('oc,bcl->bol', p['wqkv'], xr)
        s, b = _fold_bn(*p['bn_qkv'])
        qkv = qkv * s.reshape(1, -1, 1) + b.reshape(1, -1, 1)
        qkv = qkv.reshape(B, groups, 2 * gp, L)
        q, k, v = qkv[:, :, :gp // 2], qkv[:, :, gp // 2:gp], qkv[:, :, gp:]
        qk = jnp.einsum('bgci,bgcj->bgij', q, k)
        s, b = _fold_bn(*p['bn_sim'])
        sim = qk * s.reshape(1, -1, 1, 1) + b.reshape(1, -1, 1, 1)
        sim = jax.nn.softmax(sim, axis=3)
        sv = jnp.einsum('bgij,bgcj->bgci', sim, v).reshape(B, op, L)
        s, b = _fold_bn(*p['bn_out'])
        out = sv * s.reshape(1, -1, 1) + b.reshape(1, -1, 1)
        if width_flag:
            return out.reshape(N, H, op, W).transpose(0, 2, 1, 3)
        return out.reshape(N, W, op, H).transpose(0, 2, 3, 1)

    identity = x
    out = jnp.einsum('oc,nchw->nohw', params['conv_down'], x)
    out = jnp.maximum(bn4(out, params['bn1']), 0.0)
    out = attn(out, params['hight'], False)
    out = attn(out, params['width'], True)
    out = jnp.maximum(out, 0.0)
    out = jnp.einsum('oc,nchw->nohw', params['conv_up'], out)
    out = bn4(out, params['bn2']) + identity
    return jnp.maximum(out, 0.0)


# ---------------------------------------------------------------------------
# Deterministic parameter init
# ---------------------------------------------------------------------------
def init_bn(key, c):
    k1, k2, k3, k4 = jax.random.split(key, 4)
    gamma = 1.0 + 0.1 * jax.random.normal(k1, (c,), jnp.float32)
    beta = 0.1 * jax.random.normal(k2, (c,), jnp.float32)
    mean = 0.1 * jax.random.normal(k3, (c,), jnp.float32)
    var = 1.0 + 0.2 * jax.random.uniform(k4, (c,), jnp.float32)
    return gamma, beta, mean, var


def init_attention(key, in_planes, out_planes, groups):
    k1, k2, k3, k4 = jax.random.split(key, 4)
    wqkv = (jnp.sqrt(1.0 / in_planes)
            * jax.random.normal(k1, (out_planes * 2, in_planes), jnp.float32))
    return {
        'wqkv': wqkv,
        'bn_qkv': init_bn(k2, out_planes * 2),
        'bn_sim': init_bn(k3, groups),
        'bn_out': init_bn(k4, out_planes),
    }


def init_params(key, inplanes, planes, base_width=64, groups=1, expansion=2):
    width = int(planes * (base_width / 64.0))
    ks = jax.random.split(key, 6)
    params = {
        'conv_down': (jnp.sqrt(1.0 / inplanes)
                      * jax.random.normal(ks[0], (width, inplanes), jnp.float32)),
        'bn1': init_bn(ks[1], width),
        'hight': init_attention(ks[2], width, width, groups),
        'width': init_attention(ks[3], width, width, groups),
        'conv_up': (jnp.sqrt(1.0 / width)
                    * jax.random.normal(ks[4], (planes * expansion, width), jnp.float32)),
        'bn2': init_bn(ks[5], planes * expansion),
        'groups': groups,
        'group_planes': width // groups,
    }
    return params


if __name__ == "__main__":
    key = jax.random.PRNGKey(0)
    k_params, k_x = jax.random.split(key)

    # Small shapes consistent with the module: inplanes == planes*expansion so the
    # residual add works without a downsample.
    N, inplanes, H, W = 2, 8, 16, 16
    planes, groups = 4, 1

    params = init_params(k_params, inplanes, planes, groups=groups)
    x = jax.random.normal(k_x, (N, inplanes, H, W), jnp.float32)

    out = jax.block_until_ready(axial_block_forward(x, params))
    assert out.shape == (N, planes * 2, H, W), out.shape

    ref = reference_forward(x, params)
    err = float(jnp.max(jnp.abs(out - ref)))
    assert jnp.allclose(out, ref, atol=2e-3, rtol=2e-3), err

    print("KERNEL_OK")
</pallas_src>

<mosaic_0001>
module attributes {stable_mosaic.version = 11 : i64} {
  func.func @_pw_kernel(%arg0: i32, %arg1: memref<512x8xf32, #tpu.memory_space<vmem>>, %arg2: memref<8x4xf32, #tpu.memory_space<vmem>>, %arg3: memref<1x4xf32, #tpu.memory_space<vmem>>, %arg4: memref<512x4xf32, #tpu.memory_space<vmem>>) attributes {dimension_semantics = [#tpu.dimension_semantics<parallel>], iteration_bounds = array<i64: 1>, scalar_prefetch = 0 : i64, scratch_operands = 0 : i64, tpu.core_type = #tpu.core_type<tc>, window_params = [{transform_indices = @transform_0, window_bounds = array<i64: 512, 8>}, {pipeline_mode = #tpu.pipeline_mode<synchronous>, transform_indices = @transform_1, window_bounds = array<i64: 8, 4>}, {pipeline_mode = #tpu.pipeline_mode<synchronous>, transform_indices = @transform_2, window_bounds = array<i64: 1, 4>}, {transform_indices = @transform_3, window_bounds = array<i64: 512, 4>}]} {
    %c0 = arith.constant 0 : index
    %c0_0 = arith.constant 0 : index
    %0 = vector.load %arg1[%c0, %c0_0] : memref<512x8xf32, #tpu.memory_space<vmem>>, vector<512x8xf32>
    %c0_1 = arith.constant 0 : index
    %c0_2 = arith.constant 0 : index
    %1 = vector.load %arg2[%c0_1, %c0_2] : memref<8x4xf32, #tpu.memory_space<vmem>>, vector<8x4xf32>
    %cst = arith.constant dense<0.000000e+00> : vector<512x4xf32>
    %2 = tpu.matmul %0, %1, %cst {dimension_numbers = #tpu.dot_dimension_numbers<[1], [0], [0], [1], [0, 0, 1, 1], [], []>} : vector<512x8xf32>, vector<8x4xf32>, vector<512x4xf32> -> vector<512x4xf32>
    %c0_3 = arith.constant 0 : index
    %c0_4 = arith.constant 0 : index
    %3 = vector.load %arg3[%c0_3, %c0_4] : memref<1x4xf32, #tpu.memory_space<vmem>>, vector<1x4xf32>
    %4 = vector.broadcast %3 : vector<1x4xf32> to vector<512x4xf32>
    %5 = arith.addf %2, %4 : vector<512x4xf32>
    %cst_5 = arith.constant 0.000000e+00 : f32
    %6 = vector.broadcast %cst_5 : f32 to vector<512x4xf32>
    %7 = arith.maximumf %5, %6 : vector<512x4xf32>
    %c0_6 = arith.constant 0 : index
    %c0_7 = arith.constant 0 : index
    %8 = vector.load %arg4[%c0_6, %c0_7] : memref<512x4xf32, #tpu.memory_space<vmem>>, vector<512x4xf32>
    tpu.vector_store %arg4[%c0_6, %c0_7], %7 {strides = array<i32>} : memref<512x4xf32, #tpu.memory_space<vmem>>, vector<512x4xf32>,
    return
  }
  func.func @transform_0(%arg0: i32) -> (i32, i32) {
    %c0_i32 = arith.constant 0 : i32
    %c0_i32_0 = arith.constant 0 : i32
    return %arg0, %c0_i32 : i32, i32
  }
  func.func @transform_1(%arg0: i32) -> (i32, i32) {
    %c0_i32 = arith.constant 0 : i32
    %c0_i32_0 = arith.constant 0 : i32
    %c0_i32_1 = arith.constant 0 : i32
    return %c0_i32, %c0_i32_0 : i32, i32
  }
  func.func @transform_2(%arg0: i32) -> (i32, i32) {
    %c0_i32 = arith.constant 0 : i32
    %c0_i32_0 = arith.constant 0 : i32
    %c0_i32_1 = arith.constant 0 : i32
    return %c0_i32, %c0_i32_0 : i32, i32
  }
  func.func @transform_3(%arg0: i32) -> (i32, i32) {
    %c0_i32 = arith.constant 0 : i32
    %c0_i32_0 = arith.constant 0 : i32
    return %arg0, %c0_i32 : i32, i32
  }
}

</mosaic_0001>

<llo_original>
// kernel: tpu_custom_call.1
$region0: #{tpu_custom_call.1}
  #allocation0 [shape = 'u32[]', space=smem, size = 0x4, offset = 0x4, fixed_abs, tag = 'smem constant byte address 0x4 - core index']
  #allocation1 [shape = 'u32[144,128]{1,0:T(1,128)}', space=vmem, size = 0x12000, scoped, tag = 'internal scratch']
  %s0 = inlined_call_operand.vmem [shape: f32[512,8], index: 0, kind: input, shape index: {}]
  %s1 = inlined_call_operand.vmem [shape: f32[8,4], index: 1, kind: input, shape index: {}]
  %s2 = inlined_call_operand.vmem [shape: f32[1,4], index: 2, kind: input, shape index: {}]
  %s3 = inlined_call_operand.vmem [shape: f32[512,4], index: 3, kind: output, shape index: {}]
  %s4 = sld [smem:[#allocation0]]
  $region22: #{tpu_custom_call.1} parent=0
    _
  %s6 = ssub.s32 1, %s4
  %s7 = scalar_select 0, %s6, %s4
  // Predicated region
  $region2: #{tpu_custom_call.1} parent=0 // pred_check
    _
  $region3: #{tpu_custom_call.1} parent=0 // pred_check_branch
    %9 = sbr.rel (0) target = $region5
  $region4: #{tpu_custom_call.1} parent=0 // pred_region
    _
  $region5: #{tpu_custom_call.1} parent=0 // pred_fallthru
    _
  // Predicated region
  $region6: #{tpu_custom_call.1} parent=0 // pred_check
    _
  $region7: #{tpu_custom_call.1} parent=0 // pred_check_branch
    %11 = sbr.rel (0) target = $region9
  $region8: #{tpu_custom_call.1} parent=0 // pred_region
    _
  $region9: #{tpu_custom_call.1} parent=0 // pred_fallthru
    _
  // Predicated region
  $region10: #{tpu_custom_call.1} parent=0 // pred_check
    _
  $region11: #{tpu_custom_call.1} parent=0 // pred_check_branch
    %13 = sbr.rel (0) target = $region13
  $region12: #{tpu_custom_call.1} parent=0 // pred_region
    _
  $region13: #{tpu_custom_call.1} parent=0 // pred_fallthru
    _
  %v14 = vld [vmem:[%s0] sm:$0xff]
  %v15 = vld [vmem:[%s0 + $0x8] sm:$0xff]
  %v16 = vld [vmem:[%s0 + $0x10] sm:$0xff]
  %v17 = vld [vmem:[%s0 + $0x18] sm:$0xff]
  %v18 = vld [vmem:[%s0 + $0x20] sm:$0xff]
  %v19 = vld [vmem:[%s0 + $0x28] sm:$0xff]
  %v20 = vld [vmem:[%s0 + $0x30] sm:$0xff]
  %v21 = vld [vmem:[%s0 + $0x38] sm:$0xff]
  %v22 = vld [vmem:[%s0 + $0x40] sm:$0xff]
  %v23 = vld [vmem:[%s0 + $0x48] sm:$0xff]
  %v24 = vld [vmem:[%s0 + $0x50] sm:$0xff]
  %v25 = vld [vmem:[%s0 + $0x58] sm:$0xff]
  %v26 = vld [vmem:[%s0 + $0x60] sm:$0xff]
  %v27 = vld [vmem:[%s0 + $0x68] sm:$0xff]
  %v28 = vld [vmem:[%s0 + $0x70] sm:$0xff]
  %v29 = vld [vmem:[%s0 + $0x78] sm:$0xff]
  %v30 = vld [vmem:[%s0 + $0x80] sm:$0xff]
  %v31 = vld [vmem:[%s0 + $0x88] sm:$0xff]
  %v32 = vld [vmem:[%s0 + $0x90] sm:$0xff]
  %v33 = vld [vmem:[%s0 + $0x98] sm:$0xff]
  %v34 = vld [vmem:[%s0 + $0xa0] sm:$0xff]
  %v35 = vld [vmem:[%s0 + $0xa8] sm:$0xff]
  %v36 = vld [vmem:[%s0 + $0xb0] sm:$0xff]
  %v37 = vld [vmem:[%s0 + $0xb8] sm:$0xff]
  %v38 = vld [vmem:[%s0 + $0xc0] sm:$0xff]
  %v39 = vld [vmem:[%s0 + $0xc8] sm:$0xff]
  %v40 = vld [vmem:[%s0 + $0xd0] sm:$0xff]
  %v41 = vld [vmem:[%s0 + $0xd8] sm:$0xff]
  %v42 = vld [vmem:[%s0 + $0xe0] sm:$0xff]
  %v43 = vld [vmem:[%s0 + $0xe8] sm:$0xff]
  %v44 = vld [vmem:[%s0 + $0xf0] sm:$0xff]
  %v45 = vld [vmem:[%s0 + $0xf8] sm:$0xff]
  %v46 = vld [vmem:[%s0 + $0x100] sm:$0xff]
  %v47 = vld [vmem:[%s0 + $0x108] sm:$0xff]
  %v48 = vld [vmem:[%s0 + $0x110] sm:$0xff]
  %v49 = vld [vmem:[%s0 + $0x118] sm:$0xff]
  %v50 = vld [vmem:[%s0 + $0x120] sm:$0xff]
  %v51 = vld [vmem:[%s0 + $0x128] sm:$0xff]
  %v52 = vld [vmem:[%s0 + $0x130] sm:$0xff]
  %v53 = vld [vmem:[%s0 + $0x138] sm:$0xff]
  %v54 = vld [vmem:[%s0 + $0x140] sm:$0xff]
  %v55 = vld [vmem:[%s0 + $0x148] sm:$0xff]
  %v56 = vld [vmem:[%s0 + $0x150] sm:$0xff]
  %v57 = vld [vmem:[%s0 + $0x158] sm:$0xff]
  %v58 = vld [vmem:[%s0 + $0x160] sm:$0xff]
  %v59 = vld [vmem:[%s0 + $0x168] sm:$0xff]
  %v60 = vld [vmem:[%s0 + $0x170] sm:$0xff]
  %v61 = vld [vmem:[%s0 + $0x178] sm:$0xff]
  %v62 = vld [vmem:[%s0 + $0x180] sm:$0xff]
  %v63 = vld [vmem:[%s0 + $0x188] sm:$0xff]
  %v64 = vld [vmem:[%s0 + $0x190] sm:$0xff]
  %v65 = vld [vmem:[%s0 + $0x198] sm:$0xff]
  %v66 = vld [vmem:[%s0 + $0x1a0] sm:$0xff]
  %v67 = vld [vmem:[%s0 + $0x1a8] sm:$0xff]
  %v68 = vld [vmem:[%s0 + $0x1b0] sm:$0xff]
  %v69 = vld [vmem:[%s0 + $0x1b8] sm:$0xff]
  %v70 = vld [vmem:[%s0 + $0x1c0] sm:$0xff]
  %v71 = vld [vmem:[%s0 + $0x1c8] sm:$0xff]
  %v72 = vld [vmem:[%s0 + $0x1d0] sm:$0xff]
  %v73 = vld [vmem:[%s0 + $0x1d8] sm:$0xff]
  %v74 = vld [vmem:[%s0 + $0x1e0] sm:$0xff]
  %v75 = vld [vmem:[%s0 + $0x1e8] sm:$0xff]
  %v76 = vld [vmem:[%s0 + $0x1f0] sm:$0xff]
  %v77 = vld [vmem:[%s0 + $0x1f8] sm:$0xff]
  %v78 = vld [vmem:[%s1] sm:$0xff]
  %v79 = vld [vmem:[%s2] sm:$0x1]
  %v81 = vlaneseq
  %v82 = vshrl.u32 %v81, 7
  %v83 = vsub.s32 0, %v82
  %v84 = vrot.slane %v79, %v83
  %vm86 = vcmask 64512
  %v88 = vsel %vm86, %v14, 0
  %v91 = vsel %vm86, %v15, 0
  %v94 = vsel %vm86, %v16, 0
  %v97 = vsel %vm86, %v17, 0
  %v100 = vsel %vm86, %v18, 0
  %v103 = vsel %vm86, %v19, 0
  %v106 = vsel %vm86, %v20, 0
  %v109 = vsel %vm86, %v21, 0
  %v112 = vsel %vm86, %v22, 0
  %v115 = vsel %vm86, %v23, 0
  %v118 = vsel %vm86, %v24, 0
  %v121 = vsel %vm86, %v25, 0
  %v124 = vsel %vm86, %v26, 0
  %v127 = vsel %vm86, %v27, 0
  %v130 = vsel %vm86, %v28, 0
  %v133 = vsel %vm86, %v29, 0
  %v136 = vsel %vm86, %v30, 0
  %v139 = vsel %vm86, %v31, 0
  %v142 = vsel %vm86, %v32, 0
  %v145 = vsel %vm86, %v33, 0
  %v148 = vsel %vm86, %v34, 0
  %v151 = vsel %vm86, %v35, 0
  %v154 = vsel %vm86, %v36, 0
  %v157 = vsel %vm86, %v37, 0
  %v160 = vsel %vm86, %v38, 0
  %v163 = vsel %vm86, %v39, 0
  %v166 = vsel %vm86, %v40, 0
  %v169 = vsel %vm86, %v41, 0
  %v172 = vsel %vm86, %v42, 0
  %v175 = vsel %vm86, %v43, 0
  %v178 = vsel %vm86, %v44, 0
  %v181 = vsel %vm86, %v45, 0
  %v184 = vsel %vm86, %v46, 0
  %v187 = vsel %vm86, %v47, 0
  %v190 = vsel %vm86, %v48, 0
  %v193 = vsel %vm86, %v49, 0
  %v196 = vsel %vm86, %v50, 0
  %v199 = vsel %vm86, %v51, 0
  %v202 = vsel %vm86, %v52, 0
  %v205 = vsel %vm86, %v53, 0
  %v208 = vsel %vm86, %v54, 0
  %v211 = vsel %vm86, %v55, 0
  %v214 = vsel %vm86, %v56, 0
  %v217 = vsel %vm86, %v57, 0
  %v220 = vsel %vm86, %v58, 0
  %v223 = vsel %vm86, %v59, 0
  %v226 = vsel %vm86, %v60, 0
  %v229 = vsel %vm86, %v61, 0
  %v232 = vsel %vm86, %v62, 0
  %v235 = vsel %vm86, %v63, 0
  %v238 = vsel %vm86, %v64, 0
  %v241 = vsel %vm86, %v65, 0
  %v244 = vsel %vm86, %v66, 0
  %v247 = vsel %vm86, %v67, 0
  %v250 = vsel %vm86, %v68, 0
  %v253 = vsel %vm86, %v69, 0
  %v256 = vsel %vm86, %v70, 0
  %v259 = vsel %vm86, %v71, 0
  %v262 = vsel %vm86, %v72, 0
  %v265 = vsel %vm86, %v73, 0
  %v268 = vsel %vm86, %v74, 0
  %v271 = vsel %vm86, %v75, 0
  %v274 = vsel %vm86, %v76, 0
  %v277 = vsel %vm86, %v77, 0
  %279 = vmatprep.subr.mxu0 0.0
  %280 = vmatpush1.msra.mxu0 0.0
  %281 = vmatprep.subr.mxu0 0.0
  %282 = vmatpush1.msra.mxu0 0.0
  %283 = vmatprep.subr.mxu0 0.0
  %284 = vmatpush1.msra.mxu0 0.0
  %285 = vmatprep.subr.mxu0 0.0
  %286 = vmatpush1.msra.mxu0 0.0
  %287 = vmatprep.subr.mxu0 0.0
  %288 = vmatpush1.msra.mxu0 0.0
  %289 = vmatprep.subr.mxu0 0.0
  %290 = vmatpush1.msra.mxu0 0.0
  %291 = vmatprep.subr.mxu0 0.0
  %292 = vmatpush1.msra.mxu0 0.0
  %293 = vmatprep.subr.mxu0 0.0
  %294 = vmatpush1.msra.mxu0 0.0
  %295 = vmatprep.subr.mxu0 0.0
  %296 = vmatpush1.msra.mxu0 0.0
  %297 = vmatprep.subr.mxu0 0.0
  %298 = vmatpush1.msra.mxu0 0.0
  %299 = vmatprep.subr.mxu0 0.0
  %300 = vmatpush1.msra.mxu0 0.0
  %301 = vmatprep.subr.mxu0 0.0
  %302 = vmatpush1.msra.mxu0 0.0
  %303 = vmatprep.subr.mxu0 0.0
  %304 = vmatpush1.msra.mxu0 0.0
  %305 = vmatprep.subr.mxu0 0.0
  %306 = vmatpush1.msra.mxu0 0.0
  %307 = vmatprep.subr.mxu0 0.0
  %308 = vmatpush1.msra.mxu0 0.0
  %309 = vmatprep.subr.mxu0 0.0
  %310 = vmatpush1.msra.mxu0 %v78
  %311 = vmatprep.subr.mxu0 0.0
  %312 = vmatpush2.msra.mxu0 0.0
  %313 = vmatprep.subr.mxu0 0.0
  %314 = vmatpush2.msra.mxu0 0.0
  %315 = vmatprep.subr.mxu0 0.0
  %316 = vmatpush2.msra.mxu0 0.0
  %317 = vmatprep.subr.mxu0 0.0
  %318 = vmatpush2.msra.mxu0 0.0
  %319 = vmatprep.subr.mxu0 0.0
  %320 = vmatpush2.msra.mxu0 0.0
  %321 = vmatprep.subr.mxu0 0.0
  %322 = vmatpush2.msra.mxu0 0.0
  %323 = vmatprep.subr.mxu0 0.0
  %324 = vmatpush2.msra.mxu0 0.0
  %325 = vmatprep.subr.mxu0 0.0
  %326 = vmatpush2.msra.mxu0 0.0
  %327 = vmatprep.subr.mxu0 0.0
  %328 = vmatpush2.msra.mxu0 0.0
  %329 = vmatprep.subr.mxu0 0.0
  %330 = vmatpush2.msra.mxu0 0.0
  %331 = vmatprep.subr.mxu0 0.0
  %332 = vmatpush2.msra.mxu0 0.0
  %333 = vmatprep.subr.mxu0 0.0
  %334 = vmatpush2.msra.mxu0 0.0
  %335 = vmatprep.subr.mxu0 0.0
  %336 = vmatpush2.msra.mxu0 0.0
  %337 = vmatprep.subr.mxu0 0.0
  %338 = vmatpush2.msra.mxu0 0.0
  %339 = vmatprep.subr.mxu0 0.0
  %340 = vmatpush2.msra.mxu0 0.0
  %341 = vmatprep.subr.mxu0 0.0
  %342 = vmatpush2.msra.mxu0 0.0
  %343 = vmatprep.mubr.f32.mxu0 0.0
  %344 = vmatmul.mubr.f32.gmra.mxu0 %v88
  %v345 = vpop.f32.mrf.mxu0
  %v346 = vadd.f32 %v84, %v345
  %v347 = vpop.f32.mrf.mxu0
  %348 = vmatprep.mubr.f32.mxu0 0.0
  %349 = vmatmul.mubr.f32.gmra.mxu0 %v91
  %v350 = vpop.f32.mrf.mxu0
  %v351 = vadd.f32 %v84, %v350
  %v352 = vpop.f32.mrf.mxu0
  %353 = vmatprep.mubr.f32.mxu0 0.0
  %354 = vmatmul.mubr.f32.gmra.mxu0 %v94
  %v355 = vpop.f32.mrf.mxu0
  %v356 = vadd.f32 %v84, %v355
  %v357 = vpop.f32.mrf.mxu0
  %358 = vmatprep.mubr.f32.mxu0 0.0
  %359 = vmatmul.mubr.f32.gmra.mxu0 %v97
  %v360 = vpop.f32.mrf.mxu0
  %v361 = vadd.f32 %v84, %v360
  %v362 = vpop.f32.mrf.mxu0
  %363 = vmatprep.mubr.f32.mxu0 0.0
  %364 = vmatmul.mubr.f32.gmra.mxu0 %v100
  %v365 = vpop.f32.mrf.mxu0
  %v366 = vadd.f32 %v84, %v365
  %v367 = vpop.f32.mrf.mxu0
  %368 = vmatprep.mubr.f32.mxu0 0.0
  %369 = vmatmul.mubr.f32.gmra.mxu0 %v103
  %v370 = vpop.f32.mrf.mxu0
  %v371 = vadd.f32 %v84, %v370
  %v372 = vpop.f32.mrf.mxu0
  %373 = vmatprep.mubr.f32.mxu0 0.0
  %374 = vmatmul.mubr.f32.gmra.mxu0 %v106
  %v375 = vpop.f32.mrf.mxu0
  %v376 = vadd.f32 %v84, %v375
  %v377 = vpop.f32.mrf.mxu0
  %378 = vmatprep.mubr.f32.mxu0 0.0
  %379 = vmatmul.mubr.f32.gmra.mxu0 %v109
  %v380 = vpop.f32.mrf.mxu0
  %v381 = vadd.f32 %v84, %v380
  %v382 = vpop.f32.mrf.mxu0
  %383 = vmatprep.mubr.f32.mxu0 0.0
  %384 = vmatmul.mubr.f32.gmra.mxu0 %v112
  %v385 = vpop.f32.mrf.mxu0
  %v386 = vadd.f32 %v84, %v385
  %v387 = vpop.f32.mrf.mxu0
  %388 = vmatprep.mubr.f32.mxu0 0.0
  %389 = vmatmul.mubr.f32.gmra.mxu0 %v115
  %v390 = vpop.f32.mrf.mxu0
  %v391 = vadd.f32 %v84, %v390
  %v392 = vpop.f32.mrf.mxu0
  %393 = vmatprep.mubr.f32.mxu0 0.0
  %394 = vmatmul.mubr.f32.gmra.mxu0 %v118
  %v395 = vpop.f32.mrf.mxu0
  %v396 = vadd.f32 %v84, %v395
  %v397 = vpop.f32.mrf.mxu0
  %398 = vmatprep.mubr.f32.mxu0 0.0
  %399 = vmatmul.mubr.f32.gmra.mxu0 %v121
  %v400 = vpop.f32.mrf.mxu0
  %v401 = vadd.f32 %v84, %v400
  %v402 = vpop.f32.mrf.mxu0
  %403 = vmatprep.mubr.f32.mxu0 0.0
  %404 = vmatmul.mubr.f32.gmra.mxu0 %v124
  %v405 = vpop.f32.mrf.mxu0
  %v406 = vadd.f32 %v84, %v405
  %v407 = vpop.f32.mrf.mxu0
  %408 = vmatprep.mubr.f32.mxu0 0.0
  %409 = vmatmul.mubr.f32.gmra.mxu0 %v127
  %v410 = vpop.f32.mrf.mxu0
  %v411 = vadd.f32 %v84, %v410
  %v412 = vpop.f32.mrf.mxu0
  %413 = vmatprep.mubr.f32.mxu0 0.0
  %414 = vmatmul.mubr.f32.gmra.mxu0 %v130
  %v415 = vpop.f32.mrf.mxu0
  %v416 = vadd.f32 %v84, %v415
  %v417 = vpop.f32.mrf.mxu0
  %418 = vmatprep.mubr.f32.mxu0 0.0
  %419 = vmatmul.mubr.f32.gmra.mxu0 %v133
  %v420 = vpop.f32.mrf.mxu0
  %v421 = vadd.f32 %v84, %v420
  %v422 = vpop.f32.mrf.mxu0
  %423 = vmatprep.mubr.f32.mxu0 0.0
  %424 = vmatmul.mubr.f32.gmra.mxu0 %v136
  %v425 = vpop.f32.mrf.mxu0
  %v426 = vadd.f32 %v84, %v425
  %v427 = vpop.f32.mrf.mxu0
  %428 = vmatprep.mubr.f32.mxu0 0.0
  %429 = vmatmul.mubr.f32.gmra.mxu0 %v139
  %v430 = vpop.f32.mrf.mxu0
  %v431 = vadd.f32 %v84, %v430
  %v432 = vpop.f32.mrf.mxu0
  %433 = vmatprep.mubr.f32.mxu0 0.0
  %434 = vmatmul.mubr.f32.gmra.mxu0 %v142
  %v435 = vpop.f32.mrf.mxu0
  %v436 = vadd.f32 %v84, %v435
  %v437 = vpop.f32.mrf.mxu0
  %438 = vmatprep.mubr.f32.mxu0 0.0
  %439 = vmatmul.mubr.f32.gmra.mxu0 %v145
  %v440 = vpop.f32.mrf.mxu0
  %v441 = vadd.f32 %v84, %v440
  %v442 = vpop.f32.mrf.mxu0
  %443 = vmatprep.mubr.f32.mxu0 0.0
  %444 = vmatmul.mubr.f32.gmra.mxu0 %v148
  %v445 = vpop.f32.mrf.mxu0
  %v446 = vadd.f32 %v84, %v445
  %v447 = vpop.f32.mrf.mxu0
  %448 = vmatprep.mubr.f32.mxu0 0.0
  %449 = vmatmul.mubr.f32.gmra.mxu0 %v151
  %v450 = vpop.f32.mrf.mxu0
  %v451 = vadd.f32 %v84, %v450
  %v452 = vpop.f32.mrf.mxu0
  %453 = vmatprep.mubr.f32.mxu0 0.0
  %454 = vmatmul.mubr.f32.gmra.mxu0 %v154
  %v455 = vpop.f32.mrf.mxu0
  %v456 = vadd.f32 %v84, %v455
  %v457 = vpop.f32.mrf.mxu0
  %458 = vmatprep.mubr.f32.mxu0 0.0
  %459 = vmatmul.mubr.f32.gmra.mxu0 %v157
  %v460 = vpop.f32.mrf.mxu0
  %v461 = vadd.f32 %v84, %v460
  %v462 = vpop.f32.mrf.mxu0
  %463 = vmatprep.mubr.f32.mxu0 0.0
  %464 = vmatmul.mubr.f32.gmra.mxu0 %v160
  %v465 = vpop.f32.mrf.mxu0
  %v466 = vadd.f32 %v84, %v465
  %v467 = vpop.f32.mrf.mxu0
  %468 = vmatprep.mubr.f32.mxu0 0.0
  %469 = vmatmul.mubr.f32.gmra.mxu0 %v163
  %v470 = vpop.f32.mrf.mxu0
  %v471 = vadd.f32 %v84, %v470
  %v472 = vpop.f32.mrf.mxu0
  %473 = vmatprep.mubr.f32.mxu0 0.0
  %474 = vmatmul.mubr.f32.gmra.mxu0 %v166
  %v475 = vpop.f32.mrf.mxu0
  %v476 = vadd.f32 %v84, %v475
  %v477 = vpop.f32.mrf.mxu0
  %478 = vmatprep.mubr.f32.mxu0 0.0
  %479 = vmatmul.mubr.f32.gmra.mxu0 %v169
  %v480 = vpop.f32.mrf.mxu0
  %v481 = vadd.f32 %v84, %v480
  %v482 = vpop.f32.mrf.mxu0
  %483 = vmatprep.mubr.f32.mxu0 0.0
  %484 = vmatmul.mubr.f32.gmra.mxu0 %v172
  %v485 = vpop.f32.mrf.mxu0
  %v486 = vadd.f32 %v84, %v485
  %v487 = vpop.f32.mrf.mxu0
  %488 = vmatprep.mubr.f32.mxu0 0.0
  %489 = vmatmul.mubr.f32.gmra.mxu0 %v175
  %v490 = vpop.f32.mrf.mxu0
  %v491 = vadd.f32 %v84, %v490
  %v492 = vpop.f32.mrf.mxu0
  %493 = vmatprep.mubr.f32.mxu0 0.0
  %494 = vmatmul.mubr.f32.gmra.mxu0 %v178
  %v495 = vpop.f32.mrf.mxu0
  %v496 = vadd.f32 %v84, %v495
  %v497 = vpop.f32.mrf.mxu0
  %498 = vmatprep.mubr.f32.mxu0 0.0
  %499 = vmatmul.mubr.f32.gmra.mxu0 %v181
  %v500 = vpop.f32.mrf.mxu0
  %v501 = vadd.f32 %v84, %v500
  %v502 = vpop.f32.mrf.mxu0
  %503 = vmatprep.mubr.f32.mxu0 0.0
  %504 = vmatmul.mubr.f32.gmra.mxu0 %v184
  %v505 = vpop.f32.mrf.mxu0
  %v506 = vadd.f32 %v84, %v505
  %v507 = vpop.f32.mrf.mxu0
  %508 = vmatprep.mubr.f32.mxu0 0.0
  %509 = vmatmul.mubr.f32.gmra.mxu0 %v187
  %v510 = vpop.f32.mrf.mxu0
  %v511 = vadd.f32 %v84, %v510
  %v512 = vpop.f32.mrf.mxu0
  %513 = vmatprep.mubr.f32.mxu0 0.0
  %514 = vmatmul.mubr.f32.gmra.mxu0 %v190
  %v515 = vpop.f32.mrf.mxu0
  %v516 = vadd.f32 %v84, %v515
  %v517 = vpop.f32.mrf.mxu0
  %518 = vmatprep.mubr.f32.mxu0 0.0
  %519 = vmatmul.mubr.f32.gmra.mxu0 %v193
  %v520 = vpop.f32.mrf.mxu0
  %v521 = vadd.f32 %v84, %v520
  %v522 = vpop.f32.mrf.mxu0
  %523 = vmatprep.mubr.f32.mxu0 0.0
  %524 = vmatmul.mubr.f32.gmra.mxu0 %v196
  %v525 = vpop.f32.mrf.mxu0
  %v526 = vadd.f32 %v84, %v525
  %v527 = vpop.f32.mrf.mxu0
  %528 = vmatprep.mubr.f32.mxu0 0.0
  %529 = vmatmul.mubr.f32.gmra.mxu0 %v199
  %v530 = vpop.f32.mrf.mxu0
  %v531 = vadd.f32 %v84, %v530
  %v532 = vpop.f32.mrf.mxu0
  %533 = vmatprep.mubr.f32.mxu0 0.0
  %534 = vmatmul.mubr.f32.gmra.mxu0 %v202
  %v535 = vpop.f32.mrf.mxu0
  %v536 = vadd.f32 %v84, %v535
  %v537 = vpop.f32.mrf.mxu0
  %538 = vmatprep.mubr.f32.mxu0 0.0
  %539 = vmatmul.mubr.f32.gmra.mxu0 %v205
  %v540 = vpop.f32.mrf.mxu0
  %v541 = vadd.f32 %v84, %v540
  %v542 = vpop.f32.mrf.mxu0
  %543 = vmatprep.mubr.f32.mxu0 0.0
  %544 = vmatmul.mubr.f32.gmra.mxu0 %v208
  %v545 = vpop.f32.mrf.mxu0
  %v546 = vadd.f32 %v84, %v545
  %v547 = vpop.f32.mrf.mxu0
  %548 = vmatprep.mubr.f32.mxu0 0.0
  %549 = vmatmul.mubr.f32.gmra.mxu0 %v211
  %v550 = vpop.f32.mrf.mxu0
  %v551 = vadd.f32 %v84, %v550
  %v552 = vpop.f32.mrf.mxu0
  %553 = vmatprep.mubr.f32.mxu0 0.0
  %554 = vmatmul.mubr.f32.gmra.mxu0 %v214
  %v555 = vpop.f32.mrf.mxu0
  %v556 = vadd.f32 %v84, %v555
  %v557 = vpop.f32.mrf.mxu0
  %558 = vmatprep.mubr.f32.mxu0 0.0
  %559 = vmatmul.mubr.f32.gmra.mxu0 %v217
  %v560 = vpop.f32.mrf.mxu0
  %v561 = vadd.f32 %v84, %v560
  %v562 = vpop.f32.mrf.mxu0
  %563 = vmatprep.mubr.f32.mxu0 0.0
  %564 = vmatmul.mubr.f32.gmra.mxu0 %v220
  %v565 = vpop.f32.mrf.mxu0
  %v566 = vadd.f32 %v84, %v565
  %v567 = vpop.f32.mrf.mxu0
  %568 = vmatprep.mubr.f32.mxu0 0.0
  %569 = vmatmul.mubr.f32.gmra.mxu0 %v223
  %v570 = vpop.f32.mrf.mxu0
  %v571 = vadd.f32 %v84, %v570
  %v572 = vpop.f32.mrf.mxu0
  %573 = vmatprep.mubr.f32.mxu0 0.0
  %574 = vmatmul.mubr.f32.gmra.mxu0 %v226
  %v575 = vpop.f32.mrf.mxu0
  %v576 = vadd.f32 %v84, %v575
  %v577 = vpop.f32.mrf.mxu0
  %578 = vmatprep.mubr.f32.mxu0 0.0
  %579 = vmatmul.mubr.f32.gmra.mxu0 %v229
  %v580 = vpop.f32.mrf.mxu0
  %v581 = vadd.f32 %v84, %v580
  %v582 = vpop.f32.mrf.mxu0
  %583 = vmatprep.mubr.f32.mxu0 0.0
  %584 = vmatmul.mubr.f32.gmra.mxu0 %v232
  %v585 = vpop.f32.mrf.mxu0
  %v586 = vadd.f32 %v84, %v585
  %v587 = vpop.f32.mrf.mxu0
  %588 = vmatprep.mubr.f32.mxu0 0.0
  %589 = vmatmul.mubr.f32.gmra.mxu0 %v235
  %v590 = vpop.f32.mrf.mxu0
  %v591 = vadd.f32 %v84, %v590
  %v592 = vpop.f32.mrf.mxu0
  %593 = vmatprep.mubr.f32.mxu0 0.0
  %594 = vmatmul.mubr.f32.gmra.mxu0 %v238
  %v595 = vpop.f32.mrf.mxu0
  %v596 = vadd.f32 %v84, %v595
  %v597 = vpop.f32.mrf.mxu0
  %598 = vmatprep.mubr.f32.mxu0 0.0
  %599 = vmatmul.mubr.f32.gmra.mxu0 %v241
  %v600 = vpop.f32.mrf.mxu0
  %v601 = vadd.f32 %v84, %v600
  %v602 = vpop.f32.mrf.mxu0
  %603 = vmatprep.mubr.f32.mxu0 0.0
  %604 = vmatmul.mubr.f32.gmra.mxu0 %v244
  %v605 = vpop.f32.mrf.mxu0
  %v606 = vadd.f32 %v84, %v605
  %v607 = vpop.f32.mrf.mxu0
  %608 = vmatprep.mubr.f32.mxu0 0.0
  %609 = vmatmul.mubr.f32.gmra.mxu0 %v247
  %v610 = vpop.f32.mrf.mxu0
  %v611 = vadd.f32 %v84, %v610
  %v612 = vpop.f32.mrf.mxu0
  %613 = vmatprep.mubr.f32.mxu0 0.0
  %614 = vmatmul.mubr.f32.gmra.mxu0 %v250
  %v615 = vpop.f32.mrf.mxu0
  %v616 = vadd.f32 %v84, %v615
  %v617 = vpop.f32.mrf.mxu0
  %618 = vmatprep.mubr.f32.mxu0 0.0
  %619 = vmatmul.mubr.f32.gmra.mxu0 %v253
  %v620 = vpop.f32.mrf.mxu0
  %v621 = vadd.f32 %v84, %v620
  %v622 = vpop.f32.mrf.mxu0
  %623 = vmatprep.mubr.f32.mxu0 0.0
  %624 = vmatmul.mubr.f32.gmra.mxu0 %v256
  %v625 = vpop.f32.mrf.mxu0
  %v626 = vadd.f32 %v84, %v625
  %v627 = vpop.f32.mrf.mxu0
  %628 = vmatprep.mubr.f32.mxu0 0.0
  %629 = vmatmul.mubr.f32.gmra.mxu0 %v259
  %v630 = vpop.f32.mrf.mxu0
  %v631 = vadd.f32 %v84, %v630
  %v632 = vpop.f32.mrf.mxu0
  %633 = vmatprep.mubr.f32.mxu0 0.0
  %634 = vmatmul.mubr.f32.gmra.mxu0 %v262
  %v635 = vpop.f32.mrf.mxu0
  %v636 = vadd.f32 %v84, %v635
  %v637 = vpop.f32.mrf.mxu0
  %638 = vmatprep.mubr.f32.mxu0 0.0
  %639 = vmatmul.mubr.f32.gmra.mxu0 %v265
  %v640 = vpop.f32.mrf.mxu0
  %v641 = vadd.f32 %v84, %v640
  %v642 = vpop.f32.mrf.mxu0
  %643 = vmatprep.mubr.f32.mxu0 0.0
  %644 = vmatmul.mubr.f32.gmra.mxu0 %v268
  %v645 = vpop.f32.mrf.mxu0
  %v646 = vadd.f32 %v84, %v645
  %v647 = vpop.f32.mrf.mxu0
  %648 = vmatprep.mubr.f32.mxu0 0.0
  %649 = vmatmul.mubr.f32.gmra.mxu0 %v271
  %v650 = vpop.f32.mrf.mxu0
  %v651 = vadd.f32 %v84, %v650
  %v652 = vpop.f32.mrf.mxu0
  %653 = vmatprep.mubr.f32.mxu0 0.0
  %654 = vmatmul.mubr.f32.gmra.mxu0 %v274
  %v655 = vpop.f32.mrf.mxu0
  %v656 = vadd.f32 %v84, %v655
  %v657 = vpop.f32.mrf.mxu0
  %658 = vmatprep.mubr.f32.mxu0 0.0
  %659 = vmatmul.mubr.f32.gmra.mxu0 %v277
  %v660 = vpop.f32.mrf.mxu0
  %v661 = vadd.f32 %v84, %v660
  %v662 = vpop.f32.mrf.mxu0
  %663 = vdwg.mxu0
  %v664 = vmax.f32 %v346, 0.0
  %v665 = vmax.f32 %v351, 0.0
  %v666 = vmax.f32 %v356, 0.0
  %v667 = vmax.f32 %v361, 0.0
  %v668 = vmax.f32 %v366, 0.0
  %v669 = vmax.f32 %v371, 0.0
  %v670 = vmax.f32 %v376, 0.0
  %v671 = vmax.f32 %v381, 0.0
  %v672 = vmax.f32 %v386, 0.0
  %v673 = vmax.f32 %v391, 0.0
  %v674 = vmax.f32 %v396, 0.0
  %v675 = vmax.f32 %v401, 0.0
  %v676 = vmax.f32 %v406, 0.0
  %v677 = vmax.f32 %v411, 0.0
  %v678 = vmax.f32 %v416, 0.0
  %v679 = vmax.f32 %v421, 0.0
  %v680 = vmax.f32 %v426, 0.0
  %v681 = vmax.f32 %v431, 0.0
  %v682 = vmax.f32 %v436, 0.0
  %v683 = vmax.f32 %v441, 0.0
  %v684 = vmax.f32 %v446, 0.0
  %v685 = vmax.f32 %v451, 0.0
  %v686 = vmax.f32 %v456, 0.0
  %v687 = vmax.f32 %v461, 0.0
  %v688 = vmax.f32 %v466, 0.0
  %v689 = vmax.f32 %v471, 0.0
  %v690 = vmax.f32 %v476, 0.0
  %v691 = vmax.f32 %v481, 0.0
  %v692 = vmax.f32 %v486, 0.0
  %v693 = vmax.f32 %v491, 0.0
  %v694 = vmax.f32 %v496, 0.0
  %v695 = vmax.f32 %v501, 0.0
  %v696 = vmax.f32 %v506, 0.0
  %v697 = vmax.f32 %v511, 0.0
  %v698 = vmax.f32 %v516, 0.0
  %v699 = vmax.f32 %v521, 0.0
  %v700 = vmax.f32 %v526, 0.0
  %v701 = vmax.f32 %v531, 0.0
  %v702 = vmax.f32 %v536, 0.0
  %v703 = vmax.f32 %v541, 0.0
  %v704 = vmax.f32 %v546, 0.0
  %v705 = vmax.f32 %v551, 0.0
  %v706 = vmax.f32 %v556, 0.0
  %v707 = vmax.f32 %v561, 0.0
  %v708 = vmax.f32 %v566, 0.0
  %v709 = vmax.f32 %v571, 0.0
  %v710 = vmax.f32 %v576, 0.0
  %v711 = vmax.f32 %v581, 0.0
  %v712 = vmax.f32 %v586, 0.0
  %v713 = vmax.f32 %v591, 0.0
  %v714 = vmax.f32 %v596, 0.0
  %v715 = vmax.f32 %v601, 0.0
  %v716 = vmax.f32 %v606, 0.0
  %v717 = vmax.f32 %v611, 0.0
  %v718 = vmax.f32 %v616, 0.0
  %v719 = vmax.f32 %v621, 0.0
  %v720 = vmax.f32 %v626, 0.0
  %v721 = vmax.f32 %v631, 0.0
  %v722 = vmax.f32 %v636, 0.0
  %v723 = vmax.f32 %v641, 0.0
  %v724 = vmax.f32 %v646, 0.0
  %v725 = vmax.f32 %v651, 0.0
  %v726 = vmax.f32 %v656, 0.0
  %v727 = vmax.f32 %v661, 0.0
  %vm728 = vcmask 31744
  %729 = vst.msk [vmem:[%s3] sm:$0xff] %vm728, %v664
  %730 = vst.msk [vmem:[%s3 + $0x8] sm:$0xff] %vm728, %v665
  %731 = vst.msk [vmem:[%s3 + $0x10] sm:$0xff] %vm728, %v666
  %732 = vst.msk [vmem:[%s3 + $0x18] sm:$0xff] %vm728, %v667
  %733 = vst.msk [vmem:[%s3 + $0x20] sm:$0xff] %vm728, %v668
  %734 = vst.msk [vmem:[%s3 + $0x28] sm:$0xff] %vm728, %v669
  %735 = vst.msk [vmem:[%s3 + $0x30] sm:$0xff] %vm728, %v670
  %736 = vst.msk [vmem:[%s3 + $0x38] sm:$0xff] %vm728, %v671
  %737 = vst.msk [vmem:[%s3 + $0x40] sm:$0xff] %vm728, %v672
  %738 = vst.msk [vmem:[%s3 + $0x48] sm:$0xff] %vm728, %v673
  %739 = vst.msk [vmem:[%s3 + $0x50] sm:$0xff] %vm728, %v674
  %740 = vst.msk [vmem:[%s3 + $0x58] sm:$0xff] %vm728, %v675
  %741 = vst.msk [vmem:[%s3 + $0x60] sm:$0xff] %vm728, %v676
  %742 = vst.msk [vmem:[%s3 + $0x68] sm:$0xff] %vm728, %v677
  %743 = vst.msk [vmem:[%s3 + $0x70] sm:$0xff] %vm728, %v678
  %744 = vst.msk [vmem:[%s3 + $0x78] sm:$0xff] %vm728, %v679
  %745 = vst.msk [vmem:[%s3 + $0x80] sm:$0xff] %vm728, %v680
  %746 = vst.msk [vmem:[%s3 + $0x88] sm:$0xff] %vm728, %v681
  %747 = vst.msk [vmem:[%s3 + $0x90] sm:$0xff] %vm728, %v682
  %748 = vst.msk [vmem:[%s3 + $0x98] sm:$0xff] %vm728, %v683
  %749 = vst.msk [vmem:[%s3 + $0xa0] sm:$0xff] %vm728, %v684
  %750 = vst.msk [vmem:[%s3 + $0xa8] sm:$0xff] %vm728, %v685
  %751 = vst.msk [vmem:[%s3 + $0xb0] sm:$0xff] %vm728, %v686
  %752 = vst.msk [vmem:[%s3 + $0xb8] sm:$0xff] %vm728, %v687
  %753 = vst.msk [vmem:[%s3 + $0xc0] sm:$0xff] %vm728, %v688
  %754 = vst.msk [vmem:[%s3 + $0xc8] sm:$0xff] %vm728, %v689
  %755 = vst.msk [vmem:[%s3 + $0xd0] sm:$0xff] %vm728, %v690
  %756 = vst.msk [vmem:[%s3 + $0xd8] sm:$0xff] %vm728, %v691
  %757 = vst.msk [vmem:[%s3 + $0xe0] sm:$0xff] %vm728, %v692
  %758 = vst.msk [vmem:[%s3 + $0xe8] sm:$0xff] %vm728, %v693
  %759 = vst.msk [vmem:[%s3 + $0xf0] sm:$0xff] %vm728, %v694
  %760 = vst.msk [vmem:[%s3 + $0xf8] sm:$0xff] %vm728, %v695
  %761 = vst.msk [vmem:[%s3 + $0x100] sm:$0xff] %vm728, %v696
  %762 = vst.msk [vmem:[%s3 + $0x108] sm:$0xff] %vm728, %v697
  %763 = vst.msk [vmem:[%s3 + $0x110] sm:$0xff] %vm728, %v698
  %764 = vst.msk [vmem:[%s3 + $0x118] sm:$0xff] %vm728, %v699
  %765 = vst.msk [vmem:[%s3 + $0x120] sm:$0xff] %vm728, %v700
  %766 = vst.msk [vmem:[%s3 + $0x128] sm:$0xff] %vm728, %v701
  %767 = vst.msk [vmem:[%s3 + $0x130] sm:$0xff] %vm728, %v702
  %768 = vst.msk [vmem:[%s3 + $0x138] sm:$0xff] %vm728, %v703
  %769 = vst.msk [vmem:[%s3 + $0x140] sm:$0xff] %vm728, %v704
  %770 = vst.msk [vmem:[%s3 + $0x148] sm:$0xff] %vm728, %v705
  %771 = vst.msk [vmem:[%s3 + $0x150] sm:$0xff] %vm728, %v706
  %772 = vst.msk [vmem:[%s3 + $0x158] sm:$0xff] %vm728, %v707
  %773 = vst.msk [vmem:[%s3 + $0x160] sm:$0xff] %vm728, %v708
  %774 = vst.msk [vmem:[%s3 + $0x168] sm:$0xff] %vm728, %v709
  %775 = vst.msk [vmem:[%s3 + $0x170] sm:$0xff] %vm728, %v710
  %776 = vst.msk [vmem:[%s3 + $0x178] sm:$0xff] %vm728, %v711
  %777 = vst.msk [vmem:[%s3 + $0x180] sm:$0xff] %vm728, %v712
  %778 = vst.msk [vmem:[%s3 + $0x188] sm:$0xff] %vm728, %v713
  %779 = vst.msk [vmem:[%s3 + $0x190] sm:$0xff] %vm728, %v714
  %780 = vst.msk [vmem:[%s3 + $0x198] sm:$0xff] %vm728, %v715
  %781 = vst.msk [vmem:[%s3 + $0x1a0] sm:$0xff] %vm728, %v716
  %782 = vst.msk [vmem:[%s3 + $0x1a8] sm:$0xff] %vm728, %v717
  %783 = vst.msk [vmem:[%s3 + $0x1b0] sm:$0xff] %vm728, %v718
  %784 = vst.msk [vmem:[%s3 + $0x1b8] sm:$0xff] %vm728, %v719
  %785 = vst.msk [vmem:[%s3 + $0x1c0] sm:$0xff] %vm728, %v720
  %786 = vst.msk [vmem:[%s3 + $0x1c8] sm:$0xff] %vm728, %v721
  %787 = vst.msk [vmem:[%s3 + $0x1d0] sm:$0xff] %vm728, %v722
  %788 = vst.msk [vmem:[%s3 + $0x1d8] sm:$0xff] %vm728, %v723
  %789 = vst.msk [vmem:[%s3 + $0x1e0] sm:$0xff] %vm728, %v724
  %790 = vst.msk [vmem:[%s3 + $0x1e8] sm:$0xff] %vm728, %v725
  %791 = vst.msk [vmem:[%s3 + $0x1f0] sm:$0xff] %vm728, %v726
  %792 = vst.msk [vmem:[%s3 + $0x1f8] sm:$0xff] %vm728, %v727
  // Predicated region
  $region14: #{tpu_custom_call.1} parent=0 // pred_check
    _
  $region15: #{tpu_custom_call.1} parent=0 // pred_check_branch
    %794 = sbr.rel (0) target = $region17
  $region16: #{tpu_custom_call.1} parent=0 // pred_region
    _
  $region17: #{tpu_custom_call.1} parent=0 // pred_fallthru
    _
  // Predicated region
  $region18: #{tpu_custom_call.1} parent=0 // pred_check
    _
  $region19: #{tpu_custom_call.1} parent=0 // pred_check_branch
    %796 = sbr.rel (0) target = $region21
  $region20: #{tpu_custom_call.1} parent=0 // pred_region
    _
  $region21: #{tpu_custom_call.1} parent=0 // pred_fallthru
    _

</llo_original>
